<compile_context>
chip_gen: v5e
topology: v5e:2x2
jax: 0.10.0
libtpu: 0.0.40
codegen_flags: <defaults>
</compile_context>

<pallas_src>
import functools

import jax
import jax.numpy as jnp
from jax.experimental import pallas as pl
from jax.experimental.pallas import tpu as pltpu


_MIB = 1024 * 1024
_VMEM_CAP_BYTES = 48 * _MIB          # stay well under v7x's 64 MiB physical
_RESIDENT_BUDGET_BYTES = 40 * _MIB   # K/V (+Wq) budget for the resident path


# ---------------------------------------------------------------------------
# helpers
# ---------------------------------------------------------------------------
def _round_up(x, m):
    return ((x + m - 1) // m) * m


def _pick_tile(n, preferred):
    if n >= preferred:
        return preferred
    return _round_up(max(n, 1), 16)


def _pick_reduce_tile(e_pad, preferred=512):
    # Largest multiple of 128 that divides e_pad and is <= preferred.
    if e_pad <= preferred:
        return e_pad
    best, t = 128, 128
    while t <= preferred:
        if e_pad % t == 0:
            best = t
        t += 128
    return best


def _pad2d(a, rows, cols, dtype):
    a = a.astype(dtype)
    pr, pc = rows - a.shape[0], cols - a.shape[1]
    if pr or pc:
        a = jnp.pad(a, ((0, pr), (0, pc)))
    return a


def _vmem_limit(est_bytes):
    # Explicit scoped-VMEM request (review item): estimate + headroom, capped.
    return int(min(max(est_bytes * 5 // 4 + 4 * _MIB, 32 * _MIB),
                   _VMEM_CAP_BYTES))


@functools.lru_cache(maxsize=1)
def _single_buffer_ok():
    """Probe whether pipeline_mode=pl.Buffered(1) (single-buffered constant
    blocks) is supported by this JAX/Mosaic build; fall back cleanly if not."""
    def _k(x_ref, w_ref, o_ref):
        o_ref[...] = x_ref[...] + w_ref[...]

    try:
        x = jnp.arange(16 * 128, dtype=jnp.float32).reshape(16, 128)
        w = jnp.ones((8, 128), jnp.float32)
        out = pl.pallas_call(
            _k,
            out_shape=jax.ShapeDtypeStruct((16, 128), jnp.float32),
            grid=(2,),
            in_specs=[pl.BlockSpec((8, 128), lambda i: (i, 0)),
                      pl.BlockSpec((8, 128), lambda i: (0, 0),
                                   pipeline_mode=pl.Buffered(1))],
            out_specs=pl.BlockSpec((8, 128), lambda i: (i, 0)),
        )(x, w)
        return bool(jnp.allclose(jax.block_until_ready(out), x + w))
    except Exception:   # any failure -> default (double) buffering
        return False


def _const_spec(block_shape, index_map):
    """BlockSpec for a block whose index never changes (pinned weights, resident
    K/V).  Single-buffered when supported so it does not burn 2x VMEM."""
    if _single_buffer_ok():
        return pl.BlockSpec(block_shape, index_map,
                            pipeline_mode=pl.Buffered(1))
    return pl.BlockSpec(block_shape, index_map)


# ---------------------------------------------------------------------------
# K/V projection kernel (E-axis tiled reduction; Q is fused into attention)
# ---------------------------------------------------------------------------
def _proj_kv_kernel(y_ref, wk_ref, wv_ref, k_ref, v_ref, kacc, vacc):
    e = pl.program_id(1)

    @pl.when(e == 0)
    def _init():
        kacc[...] = jnp.zeros_like(kacc)
        vacc[...] = jnp.zeros_like(vacc)

    y = y_ref[...]
    kacc[...] += jnp.dot(y, wk_ref[...], preferred_element_type=jnp.float32)
    vacc[...] += jnp.dot(y, wv_ref[...], preferred_element_type=jnp.float32)

    @pl.when(e == pl.num_programs(1) - 1)
    def _fin():
        k_ref[...] = kacc[...].astype(k_ref.dtype)
        v_ref[...] = vacc[...].astype(v_ref.dtype)


def _project_kv(y_pad, wk_pad, wv_pad, tm, out_dtype):
    s_pad, e_pad = y_pad.shape
    kp = wk_pad.shape[1]
    te = _pick_reduce_tile(e_pad)
    cd = jnp.dtype(out_dtype).itemsize

    if e_pad == te:   # weights are a single constant block -> single-buffer
        w_spec = _const_spec((te, kp), lambda i, e: (0, 0))
    else:             # weights stream along the E reduction axis
        w_spec = pl.BlockSpec((te, kp), lambda i, e: (e, 0))
    out_spec = pl.BlockSpec((tm, kp), lambda i, e: (i, 0))

    est = (2 * tm * te * cd          # x tiles (double buffered)
           + 4 * te * kp * cd        # Wk + Wv
           + 4 * tm * kp * cd        # K/V output tiles
           + 2 * tm * kp * 4)        # f32 accumulators
    return pl.pallas_call(
        _proj_kv_kernel,
        out_shape=(jax.ShapeDtypeStruct((s_pad, kp), out_dtype),
                   jax.ShapeDtypeStruct((s_pad, kp), out_dtype)),
        grid=(s_pad // tm, e_pad // te),
        in_specs=[pl.BlockSpec((tm, te), lambda i, e: (i, e)), w_spec, w_spec],
        out_specs=(out_spec, out_spec),
        scratch_shapes=[pltpu.VMEM((tm, kp), jnp.float32),
                        pltpu.VMEM((tm, kp), jnp.float32)],
        compiler_params=pltpu.CompilerParams(
            dimension_semantics=("parallel", "arbitrary"),
            vmem_limit_bytes=_vmem_limit(est)),
    )(y_pad, wk_pad, wv_pad)


# ---------------------------------------------------------------------------
# Flash attention, VMEM-resident K/V path (primary)
# ---------------------------------------------------------------------------
def _flash_resident_kernel(x_ref, wq_ref, k_ref, v_ref, o_ref, *,
                           sk, tq, tk, kp, causal, approx_recip):
    qi = pl.program_id(0)
    # Fused Q projection: x tile (tq, E) @ Wq (E, kp); scale pre-folded in Wq.
    q = jnp.dot(x_ref[...], wq_ref[...],
                preferred_element_type=jnp.float32).astype(k_ref.dtype)

    nk_valid = (sk + tk - 1) // tk   # KV chunks containing real keys
    n_full = sk // tk                # KV chunks with no padded columns
    row0 = qi * tq

    if causal:
        n_unmasked = jnp.minimum((row0 + 1) // tk, n_full)
        n_total = jnp.minimum((row0 + tq - 1) // tk + 1, nk_valid)
    else:
        n_unmasked = n_full
        n_total = nk_valid

    def step(j, carry, *, masked):
        m_prev, l_prev, acc_prev = carry
        kv0 = pl.multiple_of(j * tk, tk)
        k_blk = k_ref[pl.ds(kv0, tk), :]
        v_blk = v_ref[pl.ds(kv0, tk), :]
        s = jax.lax.dot_general(q, k_blk, (((1,), (1,)), ((), ())),
                                preferred_element_type=jnp.float32)
        keep = None
        if masked:
            col = kv0 + jax.lax.broadcasted_iota(jnp.int32, (tq, tk), 1)
            keep = col < sk
            if causal:
                row = row0 + jax.lax.broadcasted_iota(jnp.int32, (tq, tk), 0)
                keep = jnp.logical_and(keep, col <= row)
            s = jnp.where(keep, s, jnp.float32(-1e30))
        m_new = jnp.maximum(m_prev, jnp.max(s, axis=-1, keepdims=True))
        alpha = jnp.exp(m_prev - m_new)
        p = jnp.exp(s - m_new)
        if keep is not None:
            p = jnp.where(keep, p, 0.0)   # fully-masked-chunk safeguard
        l_new = alpha * l_prev + jnp.sum(p, axis=-1, keepdims=True)
        acc_new = alpha * acc_prev + jnp.dot(
            p.astype(v_blk.dtype), v_blk, preferred_element_type=jnp.float32)
        return m_new, l_new, acc_new

    carry = (jnp.full((tq, 1), -jnp.inf, jnp.float32),
             jnp.zeros((tq, 1), jnp.float32),
             jnp.zeros((tq, kp), jnp.float32))
    # Interior chunks: no iota / compare / select at all.
    carry = jax.lax.fori_loop(0, n_unmasked,
                              functools.partial(step, masked=False), carry)
    # Only diagonal-straddling and/or padded tail chunks build the mask.
    carry = jax.lax.fori_loop(n_unmasked, n_total,
                              functools.partial(step, masked=True), carry)

    _, l_f, acc_f = carry
    inv_l = pl.reciprocal(l_f, approx=approx_recip)
    o_ref[...] = (acc_f * inv_l).astype(o_ref.dtype)


def _flash_resident(x_pad, wq_pad, k, v, *, sk, tq, tk, causal, approx_recip):
    sq_pad, e_pad = x_pad.shape
    sk_pad, kp = k.shape
    cd = jnp.dtype(k.dtype).itemsize
    buf_mult = 1 if _single_buffer_ok() else 2

    kernel = functools.partial(
        _flash_resident_kernel, sk=sk, tq=tq, tk=tk, kp=kp, causal=causal,
        approx_recip=approx_recip)
    est = (buf_mult * (2 * sk_pad * kp + e_pad * kp) * cd   # K, V, Wq pinned
           + 2 * tq * e_pad * cd                            # x tile (dbl buf)
           + 2 * tq * kp * 4                                # output (dbl buf)
           + 4 * tq * tk * 4                                # score/prob temps
           + 3 * tq * kp * 4)                               # q / acc temps
    return pl.pallas_call(
        kernel,
        out_shape=jax.ShapeDtypeStruct((sq_pad, kp), jnp.float32),
        grid=(sq_pad // tq,),
        in_specs=[
            pl.BlockSpec((tq, e_pad), lambda i: (i, 0)),    # x query tile
            _const_spec((e_pad, kp), lambda i: (0, 0)),     # Wq (pinned)
            _const_spec((sk_pad, kp), lambda i: (0, 0)),    # K  (pinned)
            _const_spec((sk_pad, kp), lambda i: (0, 0)),    # V  (pinned)
        ],
        out_specs=pl.BlockSpec((tq, kp), lambda i: (i, 0)),
        compiler_params=pltpu.CompilerParams(
            dimension_semantics=("parallel",),
            vmem_limit_bytes=_vmem_limit(est)),
    )(x_pad, wq_pad, k, v)


# ---------------------------------------------------------------------------
# Flash attention, streaming fallback (K/V too large to pin in VMEM)
# ---------------------------------------------------------------------------
def _flash_stream_kernel(x_ref, wq_ref, k_ref, v_ref, o_ref,
                         q_scr, m_scr, l_scr, acc_scr, *,
                         sk, tq, tk, causal, kv_padded, approx_recip):
    qi = pl.program_id(0)
    ki = pl.program_id(1)
    nk = pl.num_programs(1)

    @pl.when(ki == 0)
    def _init():
        # Fused Q projection, computed once per query tile.
        q_scr[...] = jnp.dot(x_ref[...], wq_ref[...],
                             preferred_element_type=jnp.float32
                             ).astype(q_scr.dtype)
        m_scr[...] = jnp.full(m_scr.shape, -jnp.inf, m_scr.dtype)
        l_scr[...] = jnp.zeros(l_scr.shape, l_scr.dtype)
        acc_scr[...] = jnp.zeros(acc_scr.shape, acc_scr.dtype)

    kv_start = ki * tk
    row0 = qi * tq

    def _compute(masked):
        s = jax.lax.dot_general(
            q_scr[...], k_ref[...],
            dimension_numbers=(((1,), (1,)), ((), ())),
            preferred_element_type=jnp.float32)
        keep = None
        if masked:
            col = kv_start + jax.lax.broadcasted_iota(jnp.int32, (tq, tk), 1)
            if kv_padded:
                keep = col < sk
            if causal:
                row = row0 + jax.lax.broadcasted_iota(jnp.int32, (tq, tk), 0)
                ck = col <= row
                keep = ck if keep is None else jnp.logical_and(keep, ck)
            if keep is not None:
                s = jnp.where(keep, s, jnp.float32(-1e30))
        m_prev = m_scr[...]
        m_new = jnp.maximum(m_prev, jnp.max(s, axis=-1, keepdims=True))
        alpha = jnp.exp(m_prev - m_new)
        p = jnp.exp(s - m_new)
        if keep is not None:
            p = jnp.where(keep, p, 0.0)   # fully-masked-tile safeguard
        l_scr[...] = alpha * l_scr[...] + jnp.sum(p, axis=-1, keepdims=True)
        acc_scr[...] = alpha * acc_scr[...] + jnp.dot(
            p.astype(v_ref.dtype), v_ref[...],
            preferred_element_type=jnp.float32)
        m_scr[...] = m_new

    if causal or kv_padded:
        run = kv_start < sk
        if causal:
            run = jnp.logical_and(run, kv_start <= row0 + tq - 1)
        conds = []
        if kv_padded:
            conds.append(kv_start + tk > sk)          # tile has padded columns
        if causal:
            conds.append(kv_start + tk - 1 > row0)    # tile straddles diagonal
        need_mask = conds[0]
        for c in conds[1:]:
            need_mask = jnp.logical_or(need_mask, c)
        pl.when(jnp.logical_and(run, need_mask))(
            functools.partial(_compute, True))
        pl.when(jnp.logical_and(run, jnp.logical_not(need_mask)))(
            functools.partial(_compute, False))
    else:
        _compute(False)

    @pl.when(ki == nk - 1)
    def _fin():
        inv_l = pl.reciprocal(l_scr[...], approx=approx_recip)
        o_ref[...] = (acc_scr[...] * inv_l).astype(o_ref.dtype)


def _flash_stream(x_pad, wq_pad, k, v, *, sk, tq, tk, causal, approx_recip):
    sq_pad, e_pad = x_pad.shape
    sk_pad, kp = k.shape
    nk = sk_pad // tk
    cd = jnp.dtype(k.dtype).itemsize
    buf_mult = 1 if _single_buffer_ok() else 2

    kernel = functools.partial(
        _flash_stream_kernel, sk=sk, tq=tq, tk=tk, causal=causal,
        kv_padded=(sk_pad != sk), approx_recip=approx_recip)

    if causal:
        # Clamp the K/V block index so causally-skipped tiles map to an
        # already-resident block and trigger no new HBM DMA.
        def kv_index(i, j):
            last = jnp.minimum(((i + 1) * tq - 1) // tk, nk - 1)
            return (jnp.minimum(j, last), 0)
    else:
        def kv_index(i, j):
            return (j, 0)

    est = (2 * tq * e_pad * cd + buf_mult * e_pad * kp * cd
           + 4 * tk * kp * cd                          # K/V tiles (dbl buf)
           + 2 * tq * kp * 4                           # output
           + tq * kp * cd + 2 * tq * 4 + tq * kp * 4   # scratch
           + 4 * tq * tk * 4)                          # score/prob temps
    return pl.pallas_call(
        kernel,
        out_shape=jax.ShapeDtypeStruct((sq_pad, kp), jnp.float32),
        grid=(sq_pad // tq, nk),
        in_specs=[
            pl.BlockSpec((tq, e_pad), lambda i, j: (i, 0)),   # x query tile
            _const_spec((e_pad, kp), lambda i, j: (0, 0)),    # Wq (pinned)
            pl.BlockSpec((tk, kp), kv_index),                 # K tile
            pl.BlockSpec((tk, kp), kv_index),                 # V tile
        ],
        out_specs=pl.BlockSpec((tq, kp), lambda i, j: (i, 0)),
        scratch_shapes=[
            pltpu.VMEM((tq, kp), k.dtype),       # fused Q tile
            pltpu.VMEM((tq, 1), jnp.float32),    # running max
            pltpu.VMEM((tq, 1), jnp.float32),    # running denominator
            pltpu.VMEM((tq, kp), jnp.float32),   # output accumulator
        ],
        compiler_params=pltpu.CompilerParams(
            dimension_semantics=("parallel", "arbitrary"),
            vmem_limit_bytes=_vmem_limit(est)),
    )(x_pad, wq_pad, k, v)


# ---------------------------------------------------------------------------
# public wrapper (matches the PyTorch module forward)
# ---------------------------------------------------------------------------
def self_attention(x, weights, *, masked=False, enc_y=None,
                   compute_dtype=jnp.bfloat16, tq=256, tk=512,
                   kv_resident=None):
    """Pallas SelfAttention forward.

    x:        (seq_q, embedding_size) array, or [dec_x, enc_y] list (like the
              PyTorch module's encoder-decoder attention input).
    weights:  dict with Wq, Wk, Wv, each (embedding_size, key_size).
    kv_resident: True/False forces the VMEM-resident / streaming attention
              path; None chooses automatically from the VMEM budget.
    returns:  (seq_q, key_size) float32, matching softmax(QK^T/sqrt(k)) V.
    """
    if isinstance(x, (list, tuple)):
        x, enc_y = x
    wq, wk, wv = weights["Wq"], weights["Wk"], weights["Wv"]
    e, key_size = wq.shape
    xkv = x if enc_y is None else enc_y
    sq, sk = x.shape[0], xkv.shape[0]

    # The module only applies the causal mask when the score matrix is square.
    causal = bool(masked) and (sq == sk)

    tq_ = _pick_tile(sq, tq)
    if sq > 128 and _round_up(sq, tq_) // tq_ < 2:
        # Keep >= 2 query tiles so the "parallel" axis can split across v7x's
        # two TensorCores even for short sequences.
        tq_ = _round_up((sq + 1) // 2, 16)
    tk_ = _pick_tile(sk, tk)
    sq_pad = _round_up(sq, tq_)
    sk_pad = _round_up(sk, tk_)
    e_pad = _round_up(e, 128)
    kp = _round_up(key_size, 128)   # lane-dense head dim
    # TODO(synk): for genuinely tiny key_size most of kp is zero padding;
    # packing multiple heads into the lane dim would recover MXU utilization,
    # but this module is single-head by construction.

    cd_bytes = jnp.dtype(compute_dtype).itemsize
    approx_recip = compute_dtype != jnp.float32

    # Fold 1/sqrt(key_size) into Wq once (no per-score divide in the kernel).
    scale = 1.0 / (float(key_size) ** 0.5)
    wq_pad = _pad2d(wq * jnp.asarray(scale, wq.dtype), e_pad, kp, compute_dtype)
    wk_pad = _pad2d(wk, e_pad, kp, compute_dtype)
    wv_pad = _pad2d(wv, e_pad, kp, compute_dtype)

    # K/V projection (Q is fused into the attention kernel).
    y_pad = _pad2d(xkv, sk_pad, e_pad, compute_dtype)
    k, v = _project_kv(y_pad, wk_pad, wv_pad, tk_, compute_dtype)

    x_pad = _pad2d(x, sq_pad, e_pad, compute_dtype)

    if kv_resident is None:
        buf_mult = 1 if _single_buffer_ok() else 2
        pinned_bytes = buf_mult * (2 * sk_pad * kp + e_pad * kp) * cd_bytes
        kv_resident = pinned_bytes <= _RESIDENT_BUDGET_BYTES

    if kv_resident:
        out = _flash_resident(x_pad, wq_pad, k, v, sk=sk, tq=tq_, tk=tk_,
                              causal=causal, approx_recip=approx_recip)
    else:
        out = _flash_stream(x_pad, wq_pad, k, v, sk=sk, tq=tq_, tk=tk_,
                            causal=causal, approx_recip=approx_recip)
    return out[:sq, :key_size]


# ---------------------------------------------------------------------------
# pure-JAX reference (mirrors the PyTorch module; compute_dtype mimics the
# kernel's matmul-input precision so the bf16 fast path can be checked tightly)
# ---------------------------------------------------------------------------
def _reference(x, weights, *, masked=False, enc_y=None,
               compute_dtype=jnp.float32):
    wq, wk, wv = weights["Wq"], weights["Wk"], weights["Wv"]
    key_size = wq.shape[1]
    xkv = x if enc_y is None else enc_y
    cd = compute_dtype
    scale = 1.0 / (float(key_size) ** 0.5)
    q = jnp.dot(x.astype(cd), (wq * scale).astype(cd),
                preferred_element_type=jnp.float32).astype(cd)
    k = jnp.dot(xkv.astype(cd), wk.astype(cd),
                preferred_element_type=jnp.float32).astype(cd)
    v = jnp.dot(xkv.astype(cd), wv.astype(cd),
                preferred_element_type=jnp.float32).astype(cd)
    s = jax.lax.dot_general(q, k, (((1,), (1,)), ((), ())),
                            preferred_element_type=jnp.float32)
    if masked and s.shape[0] == s.shape[1]:
        row = jax.lax.broadcasted_iota(jnp.int32, s.shape, 0)
        col = jax.lax.broadcasted_iota(jnp.int32, s.shape, 1)
        s = jnp.where(col <= row, s, jnp.float32(-1e30))
    p = jax.nn.softmax(s, axis=-1)
    return jnp.dot(p.astype(cd), v, preferred_element_type=jnp.float32)


if __name__ == "__main__":
    key = jax.random.PRNGKey(0)
    kx, kq, kk, kv_, ky, kx2, kq2, kk2, kv2 = jax.random.split(key, 9)

    # --- small shapes (module-style usage) ----------------------------------
    seq_len, enc_len = 8, 12
    embedding_size, key_size = 32, 16
    weights = {
        "Wq": jax.random.normal(kq, (embedding_size, key_size), jnp.float32),
        "Wk": jax.random.normal(kk, (embedding_size, key_size), jnp.float32),
        "Wv": jax.random.normal(kv_, (embedding_size, key_size), jnp.float32),
    }
    x = 0.25 * jax.random.normal(kx, (seq_len, embedding_size), jnp.float32)
    enc_y = 0.25 * jax.random.normal(ky, (enc_len, embedding_size), jnp.float32)

    out_m = jax.block_until_ready(self_attention(x, weights, masked=True))
    ref_m = _reference(x, weights, masked=True, compute_dtype=jnp.bfloat16)
    assert out_m.shape == (seq_len, key_size)
    assert jnp.allclose(out_m, ref_m, atol=2e-2, rtol=2e-2), "masked bf16 mismatch"

    out_u = jax.block_until_ready(self_attention(x, weights, masked=False))
    ref_u = _reference(x, weights, masked=False, compute_dtype=jnp.bfloat16)
    assert jnp.allclose(out_u, ref_u, atol=2e-2, rtol=2e-2), "unmasked bf16 mismatch"

    out_c = jax.block_until_ready(
        self_attention([x, enc_y], weights, masked=False))
    ref_c = _reference(x, weights, masked=False, enc_y=enc_y,
                       compute_dtype=jnp.bfloat16)
    assert out_c.shape == (seq_len, key_size)
    assert jnp.allclose(out_c, ref_c, atol=2e-2, rtol=2e-2), "cross-attn bf16 mismatch"

    # strict f32 path: exact module semantics
    out_f = jax.block_until_ready(
        self_attention(x, weights, masked=True, compute_dtype=jnp.float32))
    ref_f = _reference(x, weights, masked=True, compute_dtype=jnp.float32)
    assert jnp.allclose(out_f, ref_f, atol=1e-4, rtol=1e-4), "f32 mismatch"

    # streaming (non-resident K/V) fallback path, small shapes
    out_s = jax.block_until_ready(
        self_attention(x, weights, masked=True, kv_resident=False))
    assert jnp.allclose(out_s, ref_m, atol=2e-2, rtol=2e-2), "stream bf16 mismatch"

    # --- larger causal case: multiple query tiles, interior + tail kv chunks -
    seq2, emb2, key2 = 640, 64, 32
    weights2 = {
        "Wq": jax.random.normal(kq2, (emb2, key2), jnp.float32),
        "Wk": jax.random.normal(kk2, (emb2, key2), jnp.float32),
        "Wv": jax.random.normal(kv2, (emb2, key2), jnp.float32),
    }
    x2 = 0.25 * jax.random.normal(kx2, (seq2, emb2), jnp.float32)
    ref2 = _reference(x2, weights2, masked=True, compute_dtype=jnp.bfloat16)

    out2_r = jax.block_until_ready(
        self_attention(x2, weights2, masked=True, kv_resident=True))
    assert jnp.allclose(out2_r, ref2, atol=2e-2, rtol=2e-2), "large resident mismatch"

    out2_s = jax.block_until_ready(
        self_attention(x2, weights2, masked=True, kv_resident=False))
    assert jnp.allclose(out2_s, ref2, atol=2e-2, rtol=2e-2), "large streaming mismatch"

    print("KERNEL_OK")
</pallas_src>

<mosaic_0001>
module attributes {stable_mosaic.version = 11 : i64} {
  func.func @_k(%arg0: i32, %arg1: memref<8x128xf32, #tpu.memory_space<vmem>>, %arg2: memref<8x128xf32, #tpu.memory_space<vmem>>, %arg3: memref<8x128xf32, #tpu.memory_space<vmem>>) attributes {dimension_semantics = [#tpu.dimension_semantics<arbitrary>], iteration_bounds = array<i64: 2>, scalar_prefetch = 0 : i64, scratch_operands = 0 : i64, tpu.core_type = #tpu.core_type<tc>, window_params = [{transform_indices = @transform_0, window_bounds = array<i64: 8, 128>}, {pipeline_mode = #tpu.pipeline_mode<synchronous>, transform_indices = @transform_1, window_bounds = array<i64: 8, 128>}, {transform_indices = @transform_2, window_bounds = array<i64: 8, 128>}]} {
    %c0 = arith.constant 0 : index
    %c0_0 = arith.constant 0 : index
    %0 = vector.load %arg1[%c0, %c0_0] : memref<8x128xf32, #tpu.memory_space<vmem>>, vector<8x128xf32>
    %c0_1 = arith.constant 0 : index
    %c0_2 = arith.constant 0 : index
    %1 = vector.load %arg2[%c0_1, %c0_2] : memref<8x128xf32, #tpu.memory_space<vmem>>, vector<8x128xf32>
    %2 = arith.addf %0, %1 : vector<8x128xf32>
    %c0_3 = arith.constant 0 : index
    %c0_4 = arith.constant 0 : index
    %3 = vector.load %arg3[%c0_3, %c0_4] : memref<8x128xf32, #tpu.memory_space<vmem>>, vector<8x128xf32>
    tpu.vector_store %arg3[%c0_3, %c0_4], %2 {strides = array<i32>} : memref<8x128xf32, #tpu.memory_space<vmem>>, vector<8x128xf32>,
    return
  }
  func.func @transform_0(%arg0: i32) -> (i32, i32) {
    %c0_i32 = arith.constant 0 : i32
    %c0_i32_0 = arith.constant 0 : i32
    return %arg0, %c0_i32 : i32, i32
  }
  func.func @transform_1(%arg0: i32) -> (i32, i32) {
    %c0_i32 = arith.constant 0 : i32
    %c0_i32_0 = arith.constant 0 : i32
    %c0_i32_1 = arith.constant 0 : i32
    return %c0_i32, %c0_i32_0 : i32, i32
  }
  func.func @transform_2(%arg0: i32) -> (i32, i32) {
    %c0_i32 = arith.constant 0 : i32
    %c0_i32_0 = arith.constant 0 : i32
    return %arg0, %c0_i32 : i32, i32
  }
}

module attributes {stable_mosaic.version = 11 : i64} {
  func.func @_proj_kv_kernel(%arg0: i32, %arg1: i32, %arg2: memref<16x128xbf16, #tpu.memory_space<vmem>>, %arg3: memref<128x128xbf16, #tpu.memory_space<vmem>>, %arg4: memref<128x128xbf16, #tpu.memory_space<vmem>>, %arg5: memref<16x128xbf16, #tpu.memory_space<vmem>>, %arg6: memref<16x128xbf16, #tpu.memory_space<vmem>>, %arg7: memref<16x128xf32, #tpu.memory_space<vmem>>, %arg8: memref<16x128xf32, #tpu.memory_space<vmem>>) attributes {dimension_semantics = [#tpu.dimension_semantics<parallel>, #tpu.dimension_semantics<arbitrary>], iteration_bounds = array<i64: 1, 1>, scalar_prefetch = 0 : i64, scratch_operands = 2 : i64, tpu.core_type = #tpu.core_type<tc>, window_params = [{transform_indices = @transform_0, window_bounds = array<i64: 16, 128>}, {pipeline_mode = #tpu.pipeline_mode<synchronous>, transform_indices = @transform_1, window_bounds = array<i64: 128, 128>}, {pipeline_mode = #tpu.pipeline_mode<synchronous>, transform_indices = @transform_2, window_bounds = array<i64: 128, 128>}, {transform_indices = @transform_3, window_bounds = array<i64: 16, 128>}, {transform_indices = @transform_4, window_bounds = array<i64: 16, 128>}]} {
    %c0_i32 = arith.constant 0 : i32
    %0 = arith.cmpi eq, %arg1, %c0_i32 : i32
    %1 = arith.extui %0 : i1 to i32
    %c0_i32_0 = arith.constant 0 : i32
    %2 = arith.cmpi ne, %1, %c0_i32_0 : i32
    scf.if %2 {
      %cst_17 = arith.constant 0.000000e+00 : f32
      %17 = vector.broadcast %cst_17 : f32 to vector<16x128xf32>
      %c0_18 = arith.constant 0 : index
      %c0_19 = arith.constant 0 : index
      %18 = vector.load %arg7[%c0_18, %c0_19] : memref<16x128xf32, #tpu.memory_space<vmem>>, vector<16x128xf32>
      tpu.vector_store %arg7[%c0_18, %c0_19], %17 {strides = array<i32>} : memref<16x128xf32, #tpu.memory_space<vmem>>, vector<16x128xf32>,
      %cst_20 = arith.constant 0.000000e+00 : f32
      %19 = vector.broadcast %cst_20 : f32 to vector<16x128xf32>
      %c0_21 = arith.constant 0 : index
      %c0_22 = arith.constant 0 : index
      %20 = vector.load %arg8[%c0_21, %c0_22] : memref<16x128xf32, #tpu.memory_space<vmem>>, vector<16x128xf32>
      tpu.vector_store %arg8[%c0_21, %c0_22], %19 {strides = array<i32>} : memref<16x128xf32, #tpu.memory_space<vmem>>, vector<16x128xf32>,
    } else {
    }
    %c0 = arith.constant 0 : index
    %c0_1 = arith.constant 0 : index
    %3 = vector.load %arg2[%c0, %c0_1] : memref<16x128xbf16, #tpu.memory_space<vmem>>, vector<16x128xbf16>
    %c0_2 = arith.constant 0 : index
    %c0_3 = arith.constant 0 : index
    %4 = vector.load %arg7[%c0_2, %c0_3] : memref<16x128xf32, #tpu.memory_space<vmem>>, vector<16x128xf32>
    %c0_4 = arith.constant 0 : index
    %c0_5 = arith.constant 0 : index
    %5 = vector.load %arg3[%c0_4, %c0_5] : memref<128x128xbf16, #tpu.memory_space<vmem>>, vector<128x128xbf16>
    %cst = arith.constant dense<0.000000e+00> : vector<16x128xf32>
    %6 = tpu.matmul %3, %5, %cst {dimension_numbers = #tpu.dot_dimension_numbers<[1], [0], [0], [1], [0, 0, 1, 1], [], []>} : vector<16x128xbf16>, vector<128x128xbf16>, vector<16x128xf32> -> vector<16x128xf32>
    %7 = arith.addf %4, %6 : vector<16x128xf32>
    %c0_6 = arith.constant 0 : index
    %c0_7 = arith.constant 0 : index
    %8 = vector.load %arg7[%c0_6, %c0_7] : memref<16x128xf32, #tpu.memory_space<vmem>>, vector<16x128xf32>
    tpu.vector_store %arg7[%c0_6, %c0_7], %7 {strides = array<i32>} : memref<16x128xf32, #tpu.memory_space<vmem>>, vector<16x128xf32>,
    %c0_8 = arith.constant 0 : index
    %c0_9 = arith.constant 0 : index
    %9 = vector.load %arg8[%c0_8, %c0_9] : memref<16x128xf32, #tpu.memory_space<vmem>>, vector<16x128xf32>
    %c0_10 = arith.constant 0 : index
    %c0_11 = arith.constant 0 : index
    %10 = vector.load %arg4[%c0_10, %c0_11] : memref<128x128xbf16, #tpu.memory_space<vmem>>, vector<128x128xbf16>
    %cst_12 = arith.constant dense<0.000000e+00> : vector<16x128xf32>
    %11 = tpu.matmul %3, %10, %cst_12 {dimension_numbers = #tpu.dot_dimension_numbers<[1], [0], [0], [1], [0, 0, 1, 1], [], []>} : vector<16x128xbf16>, vector<128x128xbf16>, vector<16x128xf32> -> vector<16x128xf32>
    %12 = arith.addf %9, %11 : vector<16x128xf32>
    %c0_13 = arith.constant 0 : index
    %c0_14 = arith.constant 0 : index
    %13 = vector.load %arg8[%c0_13, %c0_14] : memref<16x128xf32, #tpu.memory_space<vmem>>, vector<16x128xf32>
    tpu.vector_store %arg8[%c0_13, %c0_14], %12 {strides = array<i32>} : memref<16x128xf32, #tpu.memory_space<vmem>>, vector<16x128xf32>,
    %c0_i32_15 = arith.constant 0 : i32
    %14 = arith.cmpi eq, %arg1, %c0_i32_15 : i32
    %15 = arith.extui %14 : i1 to i32
    %c0_i32_16 = arith.constant 0 : i32
    %16 = arith.cmpi ne, %15, %c0_i32_16 : i32
    scf.if %16 {
      %c0_17 = arith.constant 0 : index
      %c0_18 = arith.constant 0 : index
      %17 = vector.load %arg7[%c0_17, %c0_18] : memref<16x128xf32, #tpu.memory_space<vmem>>, vector<16x128xf32>
      %18 = arith.truncf %17 : vector<16x128xf32> to vector<16x128xbf16>
      %c0_19 = arith.constant 0 : index
      %c0_20 = arith.constant 0 : index
      %19 = vector.load %arg5[%c0_19, %c0_20] : memref<16x128xbf16, #tpu.memory_space<vmem>>, vector<16x128xbf16>
      tpu.vector_store %arg5[%c0_19, %c0_20], %18 {strides = array<i32>} : memref<16x128xbf16, #tpu.memory_space<vmem>>, vector<16x128xbf16>,
      %c0_21 = arith.constant 0 : index
      %c0_22 = arith.constant 0 : index
      %20 = vector.load %arg8[%c0_21, %c0_22] : memref<16x128xf32, #tpu.memory_space<vmem>>, vector<16x128xf32>
      %21 = arith.truncf %20 : vector<16x128xf32> to vector<16x128xbf16>
      %c0_23 = arith.constant 0 : index
      %c0_24 = arith.constant 0 : index
      %22 = vector.load %arg6[%c0_23, %c0_24] : memref<16x128xbf16, #tpu.memory_space<vmem>>, vector<16x128xbf16>
      tpu.vector_store %arg6[%c0_23, %c0_24], %21 {strides = array<i32>} : memref<16x128xbf16, #tpu.memory_space<vmem>>, vector<16x128xbf16>,
    } else {
    }
    return
  }
  func.func @transform_0(%arg0: i32, %arg1: i32) -> (i32, i32) {
    %c0_i32 = arith.constant 0 : i32
    return %arg0, %arg1 : i32, i32
  }
  func.func @transform_1(%arg0: i32, %arg1: i32) -> (i32, i32) {
    %c0_i32 = arith.constant 0 : i32
    %c0_i32_0 = arith.constant 0 : i32
    %c0_i32_1 = arith.constant 0 : i32
    return %c0_i32, %c0_i32_0 : i32, i32
  }
  func.func @transform_2(%arg0: i32, %arg1: i32) -> (i32, i32) {
    %c0_i32 = arith.constant 0 : i32
    %c0_i32_0 = arith.constant 0 : i32
    %c0_i32_1 = arith.constant 0 : i32
    return %c0_i32, %c0_i32_0 : i32, i32
  }
  func.func @transform_3(%arg0: i32, %arg1: i32) -> (i32, i32) {
    %c0_i32 = arith.constant 0 : i32
    %c0_i32_0 = arith.constant 0 : i32
    return %arg0, %c0_i32 : i32, i32
  }
  func.func @transform_4(%arg0: i32, %arg1: i32) -> (i32, i32) {
    %c0_i32 = arith.constant 0 : i32
    %c0_i32_0 = arith.constant 0 : i32
    return %arg0, %c0_i32 : i32, i32
  }
}

</mosaic_0001>

<llo_original>
// kernel: tpu_custom_call.1
$region0: #{tpu_custom_call.1}
  #allocation0 [shape = 'u32[]', space=smem, size = 0x4, offset = 0x4, fixed_abs, tag = 'smem constant byte address 0x4 - core index']
  #allocation1 [shape = 'u32[72,128]{1,0:T(1,128)}', space=vmem, size = 0x9000, scoped, tag = 'internal scratch']
  %s0 = inlined_call_operand.hbm [shape: f32[16,128], index: 0, kind: input, shape index: {}]
  %s1 = inlined_call_operand.hbm [shape: f32[8,128], index: 1, kind: input, shape index: {}]
  %s2 = inlined_call_operand.hbm [shape: f32[16,128], index: 2, kind: output, shape index: {}]
  %s3 = sld [smem:[#allocation0]]
  $region49: #{tpu_custom_call.1} parent=0
    _
  %s5 = ssub.s32 1, %s3
  %s6 = scalar_select 0, %s5, %s3
  $region1: #{tpu_custom_call.1} parent=0
    #allocation2 [shape = 'u8[8192]{0}', space=vmem, size = 0x2000, scoped, tag = 'input window, operand 0']
    #allocation3 [shape = 's32[2]{0}', space=sflag, size = 0x8, scoped, tag = 'scoped memory for tpu_custom_call.1']
    #allocation4 [shape = 's32[2]{0}', space=sflag, size = 0x8, scoped, tag = 'scoped memory for tpu_custom_call.1']
    #allocation5 [shape = 'u8[4096]{0}', space=vmem, size = 0x1000, scoped, tag = 'input window, operand 1, single buffered']
    #allocation6 [shape = 's32[1]{0}', space=sflag, size = 0x4, scoped, tag = 'scoped memory for tpu_custom_call.1']
    #allocation7 [shape = 'u8[8192]{0}', space=vmem, size = 0x2000, scoped, tag = 'output window, operand 0']
    %7 = vsyncpa [#allocation3], 0
    %s8 = scalar_lea.sflag [#allocation3], 1
    %9 = vsyncpa %s8, 0
    %10 = vsyncpa [#allocation6], 0
    %11 = vsyncpa [#allocation4], 0
    %s12 = scalar_lea.sflag [#allocation4], 1
    %13 = vsyncpa %s12, 0
    loop: start=0, step=1, limit=4
    $region2: #{tpu_custom_call.1} parent=1 // loop_pre_header
      _
    $region3: #{tpu_custom_call.1} parent=1 // loop_header
      %s15 = sphi 0, %s19
      %p16 = scmp.ge.s32.totalorder %s15, 4
      %s25 = sphi 0, %s27
      %s28 = sphi 0, %s25
      %s29 = sphi 0, %s28
      %s45 = sphi 0, %s29
      %s49 = sphi 0, %s49
      %s51 = sphi 0, %s49
      %s52 = sphi 0, %s51
      %s66 = sphi 0, %s52
      %s72 = sphi 0, %s74
      %s75 = sphi 0, %s72
      %s76 = sphi 0, %s75
      %s92 = sphi 0, %s76
    $region4: #{tpu_custom_call.1} parent=1 // loop_header_branch
      %18 = sbr.rel (%p16) target = $region8
    $region5: #{tpu_custom_call.1} parent=1 // loop_body
      %s20 = ssub.s32 %s15, 1
      %s21 = ssub.s32 %s15, 2
      %s22 = sadd.s32 %s15, 1
      %s23 = ssub.s32 %s15, %s22
      %p24 = scmp.eq.s32.totalorder %s23, 0
      %s26 = sadd.s32 %s25, 1
      %s27 = scalar_select %p24, %s25, %s26
      %p30 = pneg %p24
      %p31 = scmp.eq.s32.totalorder %s15, 1
      %p32 = por %p30, %p31
      %p33 = scmp.ne.s32.totalorder %s25, %s28
      %p34 = scmp.eq.s32.totalorder %s15, 0
      %p35 = por %p33, %p34
      %p36 = scmp.ne.s32.totalorder %s25, %s28
      %p37 = scmp.eq.s32.totalorder %s20, 1
      %p38 = por %p36, %p37
      %p39 = scmp.ne.s32.totalorder %s28, %s29
      %p40 = scmp.eq.s32.totalorder %s20, 0
      %p41 = por %p39, %p40
      %p42 = scmp.ne.s32.totalorder %s28, %s29
      %p43 = scmp.eq.s32.totalorder %s21, 1
      %p44 = por %p42, %p43
      %p46 = scmp.ne.s32.totalorder %s29, %s45
      %p47 = scmp.eq.s32.totalorder %s21, 0
      %p48 = por %p46, %p47
      %s50 = sadd.s32 %s49, 1
      %p53 = scmp.eq.s32.totalorder %s15, 1
      %p54 = scmp.ne.s32.totalorder %s49, %s51
      %p55 = scmp.eq.s32.totalorder %s15, 0
      %p56 = por %p54, %p55
      %p57 = scmp.ne.s32.totalorder %s49, %s51
      %p58 = scmp.eq.s32.totalorder %s20, 1
      %p59 = por %p57, %p58
      %p60 = scmp.ne.s32.totalorder %s51, %s52
      %p61 = scmp.eq.s32.totalorder %s20, 0
      %p62 = por %p60, %p61
      %p63 = scmp.ne.s32.totalorder %s51, %s52
      %p64 = scmp.eq.s32.totalorder %s21, 1
      %p65 = por %p63, %p64
      %p67 = scmp.ne.s32.totalorder %s52, %s66
      %p68 = scmp.eq.s32.totalorder %s21, 0
      %p69 = por %p67, %p68
      %s70 = ssub.s32 %s15, %s22
      %p71 = scmp.eq.s32.totalorder %s70, 0
      %s73 = sadd.s32 %s72, 1
      %s74 = scalar_select %p71, %s72, %s73
      %p77 = pneg %p71
      %p78 = scmp.eq.s32.totalorder %s15, 1
      %p79 = por %p77, %p78
      %p80 = scmp.ne.s32.totalorder %s72, %s75
      %p81 = scmp.eq.s32.totalorder %s15, 0
      %p82 = por %p80, %p81
      %p83 = scmp.ne.s32.totalorder %s72, %s75
      %p84 = scmp.eq.s32.totalorder %s20, 1
      %p85 = por %p83, %p84
      %p86 = scmp.ne.s32.totalorder %s75, %s76
      %p87 = scmp.eq.s32.totalorder %s20, 0
      %p88 = por %p86, %p87
      %p89 = scmp.ne.s32.totalorder %s75, %s76
      %p90 = scmp.eq.s32.totalorder %s21, 1
      %p91 = por %p89, %p90
      %p93 = scmp.ne.s32.totalorder %s76, %s92
      %p94 = scmp.eq.s32.totalorder %s21, 0
      %p95 = por %p93, %p94
      %p96 = scmp.le.s32.totalorder 1, %s15
      %p97 = scmp.lt.s32.totalorder %s15, 3
      %p98 = pnand %p96, %p97
      %p99 = pneg %p98
      // Predicated region
      $region9: #{tpu_custom_call.1} parent=5 // pred_check
        _
      $region10: #{tpu_custom_call.1} parent=5 // pred_check_branch
        %101 = sbr.rel (%p98) target = $region12
      $region11: #{tpu_custom_call.1} parent=5 // pred_region
        %s102 = ssub.s32 %s15, 1
        // Predicated region
        $region13: #{tpu_custom_call.1} parent=11 // pred_check
          %p103 = pneg %p62
        $region14: #{tpu_custom_call.1} parent=11 // pred_check_branch
          %105 = sbr.rel (%p103) target = $region16
        $region15: #{tpu_custom_call.1} parent=11 // pred_region
          %107 = vsyncadd [#allocation6], 0
          %s109 = sshll.u32 %s1, 4
          %s110 = int_to_ptr.hbm [resolvable:$true] %s109
          %s111 = sshll.u32 [#allocation5], 4
          %s112 = int_to_ptr.vmem [resolvable:$true] %s111
          %114 = dma.hbm_to_vmem [thread:$0]  %s110, 128, %s112, [#allocation6]
        $region16: #{tpu_custom_call.1} parent=11 // pred_fallthru
          _
      $region12: #{tpu_custom_call.1} parent=5 // pred_fallthru
        _
      %p115 = scmp.lt.s32.totalorder %s15, 2
      // Predicated region
      $region17: #{tpu_custom_call.1} parent=5 // pred_check
        %p116 = pneg %p115
      $region18: #{tpu_custom_call.1} parent=5 // pred_check_branch
        %118 = sbr.rel (%p116) target = $region20
      $region19: #{tpu_custom_call.1} parent=5 // pred_region
        // Predicated region
        $region21: #{tpu_custom_call.1} parent=19 // pred_check
          %p119 = pneg %p35
        $region22: #{tpu_custom_call.1} parent=19 // pred_check_branch
          %121 = sbr.rel (%p119) target = $region24
        $region23: #{tpu_custom_call.1} parent=19 // pred_region
          %s122 = sand.u32 %s25, 1
          %s123 = scalar_lea.sflag [#allocation3], %s122
          %s124 = sand.u32 %s25, 1
          %s125 = smul.addr %s124, 8
          %s126 = scalar_lea.vmem [#allocation2], %s125
          %128 = vsyncadd %s123, 0
          %s129 = smul.addr %s15, 8
          %s130 = scalar_lea.hbm %s0, %s129
          %s132 = sshll.u32 %s130, 4
          %s133 = int_to_ptr.hbm [resolvable:$true] %s132
          %s134 = sshll.u32 %s126, 4
          %s135 = int_to_ptr.vmem [resolvable:$true] %s134
          %137 = dma.hbm_to_vmem [thread:$0]  %s133, 128, %s135, %s123
        $region24: #{tpu_custom_call.1} parent=19 // pred_fallthru
          _
      $region20: #{tpu_custom_call.1} parent=5 // pred_fallthru
        _
      %p138 = scmp.le.s32.totalorder 1, %s15
      %p139 = scmp.lt.s32.totalorder %s15, 3
      %p140 = pnand %p138, %p139
      %p141 = pneg %p140
      // Predicated region
      $region25: #{tpu_custom_call.1} parent=5 // pred_check
        _
      $region26: #{tpu_custom_call.1} parent=5 // pred_check_branch
        %143 = sbr.rel (%p140) target = $region28
      $region27: #{tpu_custom_call.1} parent=5 // pred_region
        %s144 = ssub.s32 %s15, 1
        %s145 = sand.u32 %s28, 1
        %s146 = scalar_lea.sflag [#allocation3], %s145
        %s147 = sand.u32 %s28, 1
        %s148 = smul.addr %s147, 8
        %s149 = scalar_lea.vmem [#allocation2], %s148
        // Predicated region
        $region29: #{tpu_custom_call.1} parent=27 // pred_check
          %p150 = pneg %p41
        $region30: #{tpu_custom_call.1} parent=27 // pred_check_branch
          %152 = sbr.rel (%p150) target = $region32
        $region31: #{tpu_custom_call.1} parent=27 // pred_region
          %154 = dma.done %s146, 128
        $region32: #{tpu_custom_call.1} parent=27 // pred_fallthru
          _
        // Predicated region
        $region33: #{tpu_custom_call.1} parent=27 // pred_check
          %p155 = pneg %p62
        $region34: #{tpu_custom_call.1} parent=27 // pred_check_branch
          %157 = sbr.rel (%p155) target = $region36
        $region35: #{tpu_custom_call.1} parent=27 // pred_region
          %159 = dma.done [#allocation6], 128
        $region36: #{tpu_custom_call.1} parent=27 // pred_fallthru
          _
        %s160 = sand.u32 %s28, 1
        %s161 = scalar_lea.sflag [#allocation3], %s160
        %s162 = sand.u32 %s28, 1
        %s163 = smul.addr %s162, 8
        %s164 = scalar_lea.vmem [#allocation2], %s163
        %p165 = pneg %p41
        %p166 = pneg %p38
        %p167 = pneg %p62
        %p168 = pneg %p59
        %p169 = pneg %p88
        %p170 = pneg %p85
        %s171 = sand.u32 %s75, 1
        %s172 = scalar_lea.sflag [#allocation4], %s171
        %s173 = sand.u32 %s75, 1
        %s174 = smul.addr %s173, 8
        %s175 = scalar_lea.vmem [#allocation7], %s174
        %v176 = vld [vmem:[%s149] sm:$0xff]
        %v177 = vld [vmem:[#allocation5] sm:$0xff]
        %v178 = vadd.f32 %v176, %v177
        %179 = vst [vmem:[%s175] sm:$0xff] %v178
        %s180 = sand.u32 %s75, 1
        %s181 = scalar_lea.sflag [#allocation4], %s180
        %s182 = sand.u32 %s75, 1
        %s183 = smul.addr %s182, 8
        %s184 = scalar_lea.vmem [#allocation7], %s183
        // Predicated region
        $region37: #{tpu_custom_call.1} parent=27 // pred_check
          %p185 = pneg %p85
        $region38: #{tpu_custom_call.1} parent=27 // pred_check_branch
          %187 = sbr.rel (%p185) target = $region40
        $region39: #{tpu_custom_call.1} parent=27 // pred_region
          %189 = vsyncadd %s181, 0
          %s190 = smul.addr %s20, 8
          %s191 = scalar_lea.hbm %s2, %s190
          %s193 = sshll.u32 %s184, 4
          %s194 = int_to_ptr.vmem [resolvable:$true] %s193
          %s195 = sshll.u32 %s191, 4
          %s196 = int_to_ptr.hbm [resolvable:$true] %s195
          %198 = dma.vmem_to_hbm [thread:$0]  %s194, 128, %s196, %s181
        $region40: #{tpu_custom_call.1} parent=27 // pred_fallthru
          _
      $region28: #{tpu_custom_call.1} parent=5 // pred_fallthru
        _
      %p199 = scmp.le.s32.totalorder 2, %s15
      // Predicated region
      $region41: #{tpu_custom_call.1} parent=5 // pred_check
        %p200 = pneg %p199
      $region42: #{tpu_custom_call.1} parent=5 // pred_check_branch
        %202 = sbr.rel (%p200) target = $region44
      $region43: #{tpu_custom_call.1} parent=5 // pred_region
        %s203 = ssub.s32 %s15, 2
        // Predicated region
        $region45: #{tpu_custom_call.1} parent=43 // pred_check
          %p204 = pneg %p91
        $region46: #{tpu_custom_call.1} parent=43 // pred_check_branch
          %206 = sbr.rel (%p204) target = $region48
        $region47: #{tpu_custom_call.1} parent=43 // pred_region
          %s207 = sand.u32 %s76, 1
          %s208 = scalar_lea.sflag [#allocation4], %s207
          %s209 = sand.u32 %s76, 1
          %s210 = smul.addr %s209, 8
          %s211 = scalar_lea.vmem [#allocation7], %s210
          %213 = dma.done %s208, 128
        $region48: #{tpu_custom_call.1} parent=43 // pred_fallthru
          _
      $region44: #{tpu_custom_call.1} parent=5 // pred_fallthru
        _
    $region6: #{tpu_custom_call.1} parent=1 // loop_footer
      %s19 = sadd.s32 1, %s15
    $region7: #{tpu_custom_call.1} parent=1 // loop_footer_branch
      %14 = sbr.rel target = $region3
    $region8: #{tpu_custom_call.1} parent=1 // loop_exit
      _
    %214 = vsyncpa [#allocation3], 1
    %s215 = scalar_lea.sflag [#allocation3], 1
    %216 = vsyncpa %s215, 1
    %217 = vsyncpa [#allocation6], 1
    %218 = vsyncpa [#allocation4], 1
    %s219 = scalar_lea.sflag [#allocation4], 1
    %220 = vsyncpa %s219, 1

// kernel: tpu_custom_call.1
$region0: #{tpu_custom_call.1}
  #allocation0 [shape = 'u32[]', space=smem, size = 0x4, offset = 0x4, fixed_abs, tag = 'smem constant byte address 0x4 - core index']
  #allocation1 [shape = 'u32[72,128]{1,0:T(1,128)}', space=vmem, size = 0x9000, scoped, tag = 'internal scratch']
  #allocation2 [shape = 'f32[16,128]{1,0:T(8,128)}', space=vmem, size = 0x2000, scoped, tag = 'scratch operand']
  #allocation3 [shape = 'f32[16,128]{1,0:T(8,128)}', space=vmem, size = 0x2000, scoped, tag = 'scratch operand']
  %s0 = inlined_call_operand.hbm [shape: bf16[16,128], index: 0, kind: input, shape index: {}]
  %s1 = inlined_call_operand.hbm [shape: bf16[128,128], index: 1, kind: input, shape index: {}]
  %s2 = inlined_call_operand.hbm [shape: bf16[128,128], index: 2, kind: input, shape index: {}]
  %s3 = inlined_call_operand.hbm [shape: bf16[16,128], index: 3, kind: output, shape index: {0}]
  %s4 = inlined_call_operand.hbm [shape: bf16[16,128], index: 4, kind: output, shape index: {1}]
  %5 = xla_tuple %s3, %s4
  %s6 = sld [smem:[#allocation0]]
  $region50: #{tpu_custom_call.1} parent=0
    _
  %s8 = ssub.s32 1, %s6
  %s9 = scalar_select 0, %s8, %s6
  $region1: #{tpu_custom_call.1} parent=0
    #allocation4 [shape = 'u8[4096]{0}', space=vmem, size = 0x1000, scoped, tag = 'input window, operand 0, single buffered']
    #allocation5 [shape = 's32[1]{0}', space=sflag, size = 0x4, scoped, tag = 'scoped memory for tpu_custom_call.1']
    #allocation6 [shape = 's32[1]{0}', space=sflag, size = 0x4, scoped, tag = 'scoped memory for tpu_custom_call.1']
    #allocation7 [shape = 'u8[32768]{0}', space=vmem, size = 0x8000, scoped, tag = 'input window, operand 1, single buffered']
    #allocation8 [shape = 's32[1]{0}', space=sflag, size = 0x4, scoped, tag = 'scoped memory for tpu_custom_call.1']
    #allocation9 [shape = 'u8[32768]{0}', space=vmem, size = 0x8000, scoped, tag = 'input window, operand 2, single buffered']
    #allocation10 [shape = 'u8[4096]{0}', space=vmem, size = 0x1000, scoped, tag = 'output window, operand 0, single buffered']
    #allocation11 [shape = 'u8[4096]{0}', space=vmem, size = 0x1000, scoped, tag = 'output window, operand 1, single buffered']
    #allocation12 [shape = 's32[1]{0}', space=sflag, size = 0x4, scoped, tag = 'scoped memory for tpu_custom_call.1']
    %10 = vsyncpa [#allocation5], 0
    %11 = vsyncpa [#allocation8], 0
    %12 = vsyncpa [#allocation6], 0
    %13 = vsyncpa [#allocation12], 0
    // Predicated region
    $region2: #{tpu_custom_call.1} parent=1 // pred_check
      _
    $region3: #{tpu_custom_call.1} parent=1 // pred_check_branch
      %15 = sbr.rel (0) target = $region5
    $region4: #{tpu_custom_call.1} parent=1 // pred_region
      %17 = vsyncadd [#allocation5], 0
      %s18 = sshll.u32 %s0, 4
      %s19 = int_to_ptr.hbm [resolvable:$true] %s18
      %s20 = sshll.u32 [#allocation4], 4
      %s21 = int_to_ptr.vmem [resolvable:$true] %s20
      %26 = dma.hbm_to_vmem [thread:$0]  %s19, 128, %s21, [#allocation5], 64, 64, 4
    $region5: #{tpu_custom_call.1} parent=1 // pred_fallthru
      _
    // Predicated region
    $region6: #{tpu_custom_call.1} parent=1 // pred_check
      _
    $region7: #{tpu_custom_call.1} parent=1 // pred_check_branch
      %28 = sbr.rel (0) target = $region9
    $region8: #{tpu_custom_call.1} parent=1 // pred_region
      %30 = vsyncadd [#allocation8], 0
      %s31 = sshll.u32 %s1, 4
      %s32 = int_to_ptr.hbm [resolvable:$true] %s31
      %s33 = sshll.u32 [#allocation7], 4
      %s34 = int_to_ptr.vmem [resolvable:$true] %s33
      %39 = dma.hbm_to_vmem [thread:$0]  %s32, 1024, %s34, [#allocation8], 64, 64, 4
    $region9: #{tpu_custom_call.1} parent=1 // pred_fallthru
      _
    // Predicated region
    $region10: #{tpu_custom_call.1} parent=1 // pred_check
      _
    $region11: #{tpu_custom_call.1} parent=1 // pred_check_branch
      %41 = sbr.rel (0) target = $region13
    $region12: #{tpu_custom_call.1} parent=1 // pred_region
      %43 = vsyncadd [#allocation8], 0
      %s44 = sshll.u32 %s2, 4
      %s45 = int_to_ptr.hbm [resolvable:$true] %s44
      %s46 = sshll.u32 [#allocation9], 4
      %s47 = int_to_ptr.vmem [resolvable:$true] %s46
      %52 = dma.hbm_to_vmem [thread:$0]  %s45, 1024, %s47, [#allocation8], 64, 64, 4
    $region13: #{tpu_custom_call.1} parent=1 // pred_fallthru
      _
    // Predicated region
    $region14: #{tpu_custom_call.1} parent=1 // pred_check
      _
    $region15: #{tpu_custom_call.1} parent=1 // pred_check_branch
      %54 = sbr.rel (0) target = $region17
    $region16: #{tpu_custom_call.1} parent=1 // pred_region
      %56 = dma.done [#allocation5], 128
    $region17: #{tpu_custom_call.1} parent=1 // pred_fallthru
      _
    // Predicated region
    $region18: #{tpu_custom_call.1} parent=1 // pred_check
      _
    $region19: #{tpu_custom_call.1} parent=1 // pred_check_branch
      %58 = sbr.rel (0) target = $region21
    $region20: #{tpu_custom_call.1} parent=1 // pred_region
      %60 = dma.done [#allocation8], 1024
    $region21: #{tpu_custom_call.1} parent=1 // pred_fallthru
      _
    // Predicated region
    $region22: #{tpu_custom_call.1} parent=1 // pred_check
      _
    $region23: #{tpu_custom_call.1} parent=1 // pred_check_branch
      %62 = sbr.rel (0) target = $region25
    $region24: #{tpu_custom_call.1} parent=1 // pred_region
      %64 = dma.done [#allocation8], 1024
    $region25: #{tpu_custom_call.1} parent=1 // pred_fallthru
      _
    %p65 = scmp.eq.s32.totalorder 0, 0
    // Predicated region
    $region26: #{tpu_custom_call.1} parent=1 // pred_check
      %p66 = pneg %p65
    $region27: #{tpu_custom_call.1} parent=1 // pred_check_branch
      %68 = sbr.rel (%p66) target = $region29
    $region28: #{tpu_custom_call.1} parent=1 // pred_region
      %69 = vst [vmem:[#allocation2] sm:$0xff] 0.0
      %70 = vst [vmem:[#allocation2 + $0x8] sm:$0xff] 0.0
      %71 = vst [vmem:[#allocation3] sm:$0xff] 0.0
      %72 = vst [vmem:[#allocation3 + $0x8] sm:$0xff] 0.0
    $region29: #{tpu_custom_call.1} parent=1 // pred_fallthru
      _
    %v73 = vld [vmem:[#allocation4] sm:$0xf]
    %v74 = vld [vmem:[#allocation4 + $0x4] sm:$0xf]
    %v75 = vld [vmem:[#allocation2] sm:$0xff]
    %v76 = vld [vmem:[#allocation2 + $0x8] sm:$0xff]
    %v77 = vld [vmem:[#allocation7] sm:$0xf]
    %v78 = vld [vmem:[#allocation7 + $0x4] sm:$0xf]
    %v79 = vld [vmem:[#allocation7 + $0x8] sm:$0xf]
    %v80 = vld [vmem:[#allocation7 + $0xc] sm:$0xf]
    %v81 = vld [vmem:[#allocation7 + $0x10] sm:$0xf]
    %v82 = vld [vmem:[#allocation7 + $0x14] sm:$0xf]
    %v83 = vld [vmem:[#allocation7 + $0x18] sm:$0xf]
    %v84 = vld [vmem:[#allocation7 + $0x1c] sm:$0xf]
    %v85 = vld [vmem:[#allocation7 + $0x20] sm:$0xf]
    %v86 = vld [vmem:[#allocation7 + $0x24] sm:$0xf]
    %v87 = vld [vmem:[#allocation7 + $0x28] sm:$0xf]
    %v88 = vld [vmem:[#allocation7 + $0x2c] sm:$0xf]
    %v89 = vld [vmem:[#allocation7 + $0x30] sm:$0xf]
    %v90 = vld [vmem:[#allocation7 + $0x34] sm:$0xf]
    %v91 = vld [vmem:[#allocation7 + $0x38] sm:$0xf]
    %v92 = vld [vmem:[#allocation7 + $0x3c] sm:$0xf]
    %v95 = vunpack.c.l.b16 %v73
    %v96 = vunpack.c.l.b16 %v74
    %v97 = vpack.c.b16 %v96, %v95
    %v115 = vunpack.c.l.b16 %v77
    %v116 = vunpack.c.l.b16 %v78
    %v117 = vunpack.c.l.b16 %v79
    %v118 = vunpack.c.l.b16 %v80
    %v119 = vunpack.c.l.b16 %v81
    %v120 = vunpack.c.l.b16 %v82
    %v121 = vunpack.c.l.b16 %v83
    %v122 = vunpack.c.l.b16 %v84
    %v123 = vunpack.c.l.b16 %v85
    %v124 = vunpack.c.l.b16 %v86
    %v125 = vunpack.c.l.b16 %v87
    %v126 = vunpack.c.l.b16 %v88
    %v127 = vunpack.c.l.b16 %v89
    %v128 = vunpack.c.l.b16 %v90
    %v129 = vunpack.c.l.b16 %v91
    %v130 = vunpack.c.l.b16 %v92
    %v131 = vpack.c.b16 %v116, %v115
    %v132 = vpack.c.b16 %v118, %v117
    %v133 = vpack.c.b16 %v120, %v119
    %v134 = vpack.c.b16 %v122, %v121
    %v135 = vpack.c.b16 %v124, %v123
    %v136 = vpack.c.b16 %v126, %v125
    %v137 = vpack.c.b16 %v128, %v127
    %v138 = vpack.c.b16 %v130, %v129
    %147 = vmatpush.bf16.msra.mxu0 %v138
    %148 = vmatpush.bf16.msra.mxu0 %v137
    %149 = vmatpush.bf16.msra.mxu0 %v136
    %150 = vmatpush.bf16.msra.mxu0 %v135
    %151 = vmatpush.bf16.msra.mxu0 %v134
    %152 = vmatpush.bf16.msra.mxu0 %v133
    %153 = vmatpush.bf16.msra.mxu0 %v132
    %154 = vmatpush.bf16.msra.mxu0 %v131
    %155 = vmatmul.bf16.gmra.mxu0 %v97
    %v156 = vpop.f32.mrf.mxu0
    %v157 = vadd.f32 0.0, %v156
    %v158 = vpop.f32.mrf.mxu0
    %v159 = vadd.f32 0.0, %v158
    %160 = vdwg.mxu0
    %v161 = vadd.f32 %v75, %v157
    %v162 = vadd.f32 %v76, %v159
    %163 = vst [vmem:[#allocation2] sm:$0xff] %v161
    %164 = vst [vmem:[#allocation2 + $0x8] sm:$0xff] %v162
    %v165 = vld [vmem:[#allocation3] sm:$0xff]
    %v166 = vld [vmem:[#allocation3 + $0x8] sm:$0xff]
    %v167 = vld [vmem:[#allocation9] sm:$0xf]
    %v168 = vld [vmem:[#allocation9 + $0x4] sm:$0xf]
    %v169 = vld [vmem:[#allocation9 + $0x8] sm:$0xf]
    %v170 = vld [vmem:[#allocation9 + $0xc] sm:$0xf]
    %v171 = vld [vmem:[#allocation9 + $0x10] sm:$0xf]
    %v172 = vld [vmem:[#allocation9 + $0x14] sm:$0xf]
    %v173 = vld [vmem:[#allocation9 + $0x18] sm:$0xf]
    %v174 = vld [vmem:[#allocation9 + $0x1c] sm:$0xf]
    %v175 = vld [vmem:[#allocation9 + $0x20] sm:$0xf]
    %v176 = vld [vmem:[#allocation9 + $0x24] sm:$0xf]
    %v177 = vld [vmem:[#allocation9 + $0x28] sm:$0xf]
    %v178 = vld [vmem:[#allocation9 + $0x2c] sm:$0xf]
    %v179 = vld [vmem:[#allocation9 + $0x30] sm:$0xf]
    %v180 = vld [vmem:[#allocation9 + $0x34] sm:$0xf]
    %v181 = vld [vmem:[#allocation9 + $0x38] sm:$0xf]
    %v182 = vld [vmem:[#allocation9 + $0x3c] sm:$0xf]
    %v199 = vunpack.c.l.b16 %v167
    %v200 = vunpack.c.l.b16 %v168
    %v201 = vunpack.c.l.b16 %v169
    %v202 = vunpack.c.l.b16 %v170
    %v203 = vunpack.c.l.b16 %v171
    %v204 = vunpack.c.l.b16 %v172
    %v205 = vunpack.c.l.b16 %v173
    %v206 = vunpack.c.l.b16 %v174
    %v207 = vunpack.c.l.b16 %v175
    %v208 = vunpack.c.l.b16 %v176
    %v209 = vunpack.c.l.b16 %v177
    %v210 = vunpack.c.l.b16 %v178
    %v211 = vunpack.c.l.b16 %v179
    %v212 = vunpack.c.l.b16 %v180
    %v213 = vunpack.c.l.b16 %v181
    %v214 = vunpack.c.l.b16 %v182
    %v215 = vpack.c.b16 %v200, %v199
    %v216 = vpack.c.b16 %v202, %v201
    %v217 = vpack.c.b16 %v204, %v203
    %v218 = vpack.c.b16 %v206, %v205
    %v219 = vpack.c.b16 %v208, %v207
    %v220 = vpack.c.b16 %v210, %v209
    %v221 = vpack.c.b16 %v212, %v211
    %v222 = vpack.c.b16 %v214, %v213
    %231 = vmatpush.bf16.msra.mxu0 %v222
    %232 = vmatpush.bf16.msra.mxu0 %v221
    %233 = vmatpush.bf16.msra.mxu0 %v220
    %234 = vmatpush.bf16.msra.mxu0 %v219
    %235 = vmatpush.bf16.msra.mxu0 %v218
    %236 = vmatpush.bf16.msra.mxu0 %v217
    %237 = vmatpush.bf16.msra.mxu0 %v216
    %238 = vmatpush.bf16.msra.mxu0 %v215
    %239 = vmatmul.bf16.gmra.mxu0 %v97
    %v240 = vpop.f32.mrf.mxu0
    %v241 = vadd.f32 0.0, %v240
    %v242 = vpop.f32.mrf.mxu0
    %v243 = vadd.f32 0.0, %v242
    %244 = vdwg.mxu0
    %v245 = vadd.f32 %v165, %v241
    %v246 = vadd.f32 %v166, %v243
    %247 = vst [vmem:[#allocation3] sm:$0xff] %v245
    %248 = vst [vmem:[#allocation3 + $0x8] sm:$0xff] %v246
    // Predicated region
    $region30: #{tpu_custom_call.1} parent=1 // pred_check
      %p249 = pneg %p65
    $region31: #{tpu_custom_call.1} parent=1 // pred_check_branch
      %251 = sbr.rel (%p249) target = $region33
    $region32: #{tpu_custom_call.1} parent=1 // pred_region
      %v252 = vld [vmem:[#allocation2] sm:$0xff]
      %v253 = vld [vmem:[#allocation2 + $0x8] sm:$0xff]
      %v254 = vpack.c.bf16 %v252, %v252
      %v255 = vpack.c.bf16 %v253, %v253
      %256 = vst [vmem:[#allocation10] sm:$0xf] %v254
      %257 = vst [vmem:[#allocation10 + $0x4] sm:$0xf] %v255
      %v258 = vld [vmem:[#allocation3] sm:$0xff]
      %v259 = vld [vmem:[#allocation3 + $0x8] sm:$0xff]
      %v260 = vpack.c.bf16 %v258, %v258
      %v261 = vpack.c.bf16 %v259, %v259
      %262 = vst [vmem:[#allocation11] sm:$0xf] %v260
      %263 = vst [vmem:[#allocation11 + $0x4] sm:$0xf] %v261
    $region33: #{tpu_custom_call.1} parent=1 // pred_fallthru
      _
    // Predicated region
    $region34: #{tpu_custom_call.1} parent=1 // pred_check
      _
    $region35: #{tpu_custom_call.1} parent=1 // pred_check_branch
      %265 = sbr.rel (0) target = $region37
    $region36: #{tpu_custom_call.1} parent=1 // pred_region
      %267 = vsyncadd [#allocation6], 0
      %s268 = sshll.u32 [#allocation10], 4
      %s269 = int_to_ptr.vmem [resolvable:$true] %s268
      %s270 = sshll.u32 %s3, 4
      %s271 = int_to_ptr.hbm [resolvable:$true] %s270
      %276 = dma.vmem_to_hbm [thread:$0]  %s269, 128, %s271, [#allocation6], 64, 64, 4
    $region37: #{tpu_custom_call.1} parent=1 // pred_fallthru
      _
    // Predicated region
    $region38: #{tpu_custom_call.1} parent=1 // pred_check
      _
    $region39: #{tpu_custom_call.1} parent=1 // pred_check_branch
      %278 = sbr.rel (0) target = $region41
    $region40: #{tpu_custom_call.1} parent=1 // pred_region
      %280 = vsyncadd [#allocation12], 0
      %s281 = sshll.u32 [#allocation11], 4
      %s282 = int_to_ptr.vmem [resolvable:$true] %s281
      %s283 = sshll.u32 %s4, 4
      %s284 = int_to_ptr.hbm [resolvable:$true] %s283
      %289 = dma.vmem_to_hbm [thread:$0]  %s282, 128, %s284, [#allocation12], 64, 64, 4
    $region41: #{tpu_custom_call.1} parent=1 // pred_fallthru
      _
    // Predicated region
    $region42: #{tpu_custom_call.1} parent=1 // pred_check
      _
    $region43: #{tpu_custom_call.1} parent=1 // pred_check_branch
      %291 = sbr.rel (0) target = $region45
    $region44: #{tpu_custom_call.1} parent=1 // pred_region
      %293 = dma.done [#allocation6], 128
    $region45: #{tpu_custom_call.1} parent=1 // pred_fallthru
      _
    // Predicated region
    $region46: #{tpu_custom_call.1} parent=1 // pred_check
      _
    $region47: #{tpu_custom_call.1} parent=1 // pred_check_branch
      %295 = sbr.rel (0) target = $region49
    $region48: #{tpu_custom_call.1} parent=1 // pred_region
      %297 = dma.done [#allocation12], 128
    $region49: #{tpu_custom_call.1} parent=1 // pred_fallthru
      _
    %298 = vsyncpa [#allocation5], 1
    %299 = vsyncpa [#allocation8], 1
    %300 = vsyncpa [#allocation6], 1
    %301 = vsyncpa [#allocation12], 1

</llo_original>
